<compile_context>
chip_gen: v7x
topology: tpu7x:2x2x1
jax: 0.10.0
libtpu: 0.0.40
codegen_flags: <defaults>
</compile_context>

<pallas_src>
import functools

import jax
import jax.numpy as jnp
from jax import lax
from jax.experimental import pallas as pl
from jax.experimental.pallas import tpu as pltpu


def _int_pow(xf, p):
    """x**p for positive integer p via repeated VPU multiplies (no EUP exp/log)."""
    result = None
    base = xf
    e = p
    while e > 0:
        if e & 1:
            result = base if result is None else result * base
        e >>= 1
        if e:
            base = base * base
    return result


def _normalize_kernel(x_ref, o_ref, *, power, eps):
    # x_ref block: (C, TS)  (batch dim squeezed).  Reduce over axis 0 (channels).
    p_is_int = float(power) == int(power)

    if power == 2:
        xf = x_ref[...].astype(jnp.float32)
        s = jnp.sum(xf * xf, axis=0, keepdims=True)                # (1, TS)
        if eps > 0.0:
            s = jnp.maximum(s, jnp.float32(eps))
        inv = lax.rsqrt(s)
    elif p_is_int and power >= 1:
        xf = x_ref[...].astype(jnp.float32)
        s = jnp.sum(_int_pow(xf, int(power)), axis=0, keepdims=True)
        if eps > 0.0:
            s = jnp.maximum(s, jnp.float32(eps))
        inv = s ** jnp.float32(-1.0 / power)                        # only (1, TS) on EUP
    else:
        # General (non-integer) power: keep the module's semantics exactly.
        xf = x_ref[...].astype(jnp.float32)
        s = jnp.sum(xf ** jnp.float32(power), axis=0, keepdims=True)
        if eps > 0.0:
            s = jnp.maximum(s, jnp.float32(eps))
        inv = s ** jnp.float32(-1.0 / power)

    # Re-read x_ref for the scale pass: avoids forcing a full-block f32 copy to
    # stay live across the reduction (matters for bf16/int8 inputs).
    o_ref[...] = (x_ref[...].astype(jnp.float32) * inv).astype(o_ref.dtype)


def normalize(x, power=2, eps=0.0):
    """L^p-normalize x over dim=1 (channel dim).  Matches Normalize.forward."""
    orig_shape = x.shape
    assert x.ndim >= 2, "need at least (batch, channel) dims"
    B, C = orig_shape[0], orig_shape[1]
    S = 1
    for d in orig_shape[2:]:
        S *= d
    S = max(S, 1)
    xr = x.reshape(B, C, S)
    itemsize = jnp.dtype(x.dtype).itemsize

    BLOCK_BUDGET = 4 * 1024 * 1024     # per-buffer; in+out double-buffered ~16 MiB live
    VMEM_LIMIT = 40 * 1024 * 1024      # headroom under v7x's 64 MiB physical VMEM

    # Lane-dim tile: multiples of 128 dividing S (or full S when not divisible).
    if S % 128 == 0:
        cands = [t for t in range(128, S + 1, 128) if S % t == 0]
    else:
        cands = [S]
    budget_elems = max(128, BLOCK_BUDGET // max(C * itemsize, 1))
    fits = [t for t in cands if t <= budget_elems] or [cands[0]]
    TS = fits[-1]

    # Grid-collapse guard: keep >= 8 pipelined steps when possible so v7x's two
    # TensorCores both get work and DMA/compute overlap has depth.
    while B * (S // TS) < 8:
        smaller = [t for t in fits if t < TS]
        if not smaller:
            break
        TS = smaller[-1]

    grid = (B, S // TS)

    # Large-C fallback: if even the minimum double-buffered working set would
    # blow the VMEM limit, drop to single buffering instead of failing.
    live_bytes = 2 * 2 * C * TS * itemsize
    spec_kwargs = {}
    if live_bytes > VMEM_LIMIT:
        spec_kwargs = {"pipeline_mode": pl.Buffered(1)}
        # TODO(synk): for extreme C a two-pass C-chunked scheme (manual DMA from
        # pl.ANY HBM refs) would restore pipelining; not needed at these shapes.

    block = (pl.Squeezed(), C, TS)
    index_map = lambda b, j: (b, 0, j)

    p_is_int = float(power) == int(power)
    if power == 2 or (p_is_int and power >= 1):
        trans = B * S                      # rsqrt / pow of the reduced sum only
    else:
        trans = 2 * B * C * S + B * S      # per-element exp+log from ** power
    cost = pl.CostEstimate(
        flops=3 * B * C * S,
        transcendentals=trans,
        bytes_accessed=2 * B * C * S * itemsize,
    )

    kernel = functools.partial(_normalize_kernel, power=power, eps=eps)

    out = pl.pallas_call(
        kernel,
        out_shape=jax.ShapeDtypeStruct((B, C, S), x.dtype),
        grid_spec=pltpu.PrefetchScalarGridSpec(
            num_scalar_prefetch=0,
            grid=grid,
            in_specs=[pl.BlockSpec(block, index_map, **spec_kwargs)],
            out_specs=pl.BlockSpec(block, index_map, **spec_kwargs),
        ),
        compiler_params=pltpu.CompilerParams(
            dimension_semantics=("parallel", "parallel"),
            vmem_limit_bytes=VMEM_LIMIT,
        ),
        cost_estimate=cost,
    )(xr)

    return out.reshape(orig_shape)


if __name__ == "__main__":
    key = jax.random.PRNGKey(0)
    # Small NCHW input consistent with the module's forward (reduce over dim=1).
    x = jax.random.normal(key, (2, 4, 16, 16), dtype=jnp.float32)

    out = normalize(x, power=2)
    out = jax.block_until_ready(out)

    # Pure-JAX reference (same semantics as the PyTorch forward).
    norm_ref = jnp.power(jnp.sum(jnp.power(x, 2), axis=1, keepdims=True), 0.5)
    ref = x / norm_ref
    assert out.shape == x.shape and out.dtype == x.dtype
    assert jnp.allclose(out, ref, atol=1e-5, rtol=1e-5)

    # Exercise the integer power != 2 branch (repeated-multiply pow path).
    xp = jnp.abs(x) + 0.5
    out3 = jax.block_until_ready(normalize(xp, power=3))
    norm3 = jnp.power(jnp.sum(jnp.power(xp, 3), axis=1, keepdims=True), 1.0 / 3.0)
    ref3 = xp / norm3
    assert jnp.allclose(out3, ref3, atol=1e-4, rtol=1e-4)

    print("KERNEL_OK")
</pallas_src>

<mosaic_0001>
module attributes {stable_mosaic.version = 11 : i64} {
  func.func @_normalize_kernel(%arg0: i32, %arg1: i32, %arg2: memref<1x4x128xf32, #tpu.memory_space<vmem>>, %arg3: memref<1x4x128xf32, #tpu.memory_space<vmem>>) attributes {dimension_semantics = [#tpu.dimension_semantics<parallel>, #tpu.dimension_semantics<parallel>], iteration_bounds = array<i64: 2, 2>, scalar_prefetch = 0 : i64, scratch_operands = 0 : i64, tpu.core_type = #tpu.core_type<tc>, window_params = [{transform_indices = @transform_0, window_bounds = array<i64: 1, 4, 128>}, {transform_indices = @transform_1, window_bounds = array<i64: 1, 4, 128>}]} {
    %c0 = arith.constant 0 : index
    %c0_0 = arith.constant 0 : index
    %c0_1 = arith.constant 0 : index
    %0 = vector.load %arg2[%c0, %c0_0, %c0_1] : memref<1x4x128xf32, #tpu.memory_space<vmem>>, vector<1x4x128xf32>
    %1 = vector.shape_cast %0 : vector<1x4x128xf32> to vector<4x128xf32>
    %2 = arith.mulf %1, %1 : vector<4x128xf32>
    %cst = arith.constant dense<0.000000e+00> : vector<128xf32>
    %3 = vector.multi_reduction <add>, %2, %cst [0] : vector<4x128xf32> to vector<128xf32>
    %4 = vector.shape_cast %3 : vector<128xf32> to vector<1x128xf32>
    %5 = math.rsqrt %4 : vector<1x128xf32>
    %c0_2 = arith.constant 0 : index
    %c0_3 = arith.constant 0 : index
    %c0_4 = arith.constant 0 : index
    %6 = vector.load %arg2[%c0_2, %c0_3, %c0_4] : memref<1x4x128xf32, #tpu.memory_space<vmem>>, vector<1x4x128xf32>
    %7 = vector.shape_cast %6 : vector<1x4x128xf32> to vector<4x128xf32>
    %8 = vector.broadcast %5 : vector<1x128xf32> to vector<4x128xf32>
    %9 = arith.mulf %7, %8 : vector<4x128xf32>
    %c0_5 = arith.constant 0 : index
    %c0_6 = arith.constant 0 : index
    %c0_7 = arith.constant 0 : index
    %10 = vector.load %arg3[%c0_5, %c0_6, %c0_7] : memref<1x4x128xf32, #tpu.memory_space<vmem>>, vector<1x4x128xf32>
    %11 = vector.shape_cast %10 : vector<1x4x128xf32> to vector<4x128xf32>
    %12 = vector.shape_cast %9 : vector<4x128xf32> to vector<1x4x128xf32>
    tpu.vector_store %arg3[%c0_5, %c0_6, %c0_7], %12 {strides = array<i32>} : memref<1x4x128xf32, #tpu.memory_space<vmem>>, vector<1x4x128xf32>,
    return
  }
  func.func @transform_0(%arg0: i32, %arg1: i32) -> (i32, i32, i32) {
    %c0_i32 = arith.constant 0 : i32
    %c0_i32_0 = arith.constant 0 : i32
    return %arg0, %c0_i32, %arg1 : i32, i32, i32
  }
  func.func @transform_1(%arg0: i32, %arg1: i32) -> (i32, i32, i32) {
    %c0_i32 = arith.constant 0 : i32
    %c0_i32_0 = arith.constant 0 : i32
    return %arg0, %c0_i32, %arg1 : i32, i32, i32
  }
}

</mosaic_0001>

<llo_original>
// kernel: tpu_custom_call.1
$region0: #{tpu_custom_call.1}
  #allocation0 [shape = 'u32[]', space=smem, size = 0x4, offset = 0x4, fixed_abs, tag = 'smem constant byte address 0x4 - core index']
  #allocation1 [shape = 'u32[144,128]{1,0:T(1,128)}', space=vmem, size = 0x12000, scoped, tag = 'internal scratch']
  %s0 = inlined_call_operand.hbm [shape: f32[2,4,256], index: 0, kind: input, shape index: {}]
  %s1 = inlined_call_operand.hbm [shape: f32[2,4,256], index: 1, kind: output, shape index: {}]
  %s2 = sld [smem:[#allocation0]]
  $region41: #{tpu_custom_call.1} parent=0
    _
  %s4 = ssub.s32 1, %s2
  %s5 = scalar_select 0, %s4, %s2
  $region1: #{tpu_custom_call.1} parent=0
    #allocation2 [shape = 'u8[4096]{0}', space=vmem, size = 0x1000, scoped, tag = 'input window, operand 0']
    #allocation3 [shape = 's32[2]{0}', space=sflag, size = 0x8, scoped, tag = 'scoped memory for tpu_custom_call.1']
    #allocation4 [shape = 's32[2]{0}', space=sflag, size = 0x8, scoped, tag = 'scoped memory for tpu_custom_call.1']
    #allocation5 [shape = 'u8[4096]{0}', space=vmem, size = 0x1000, scoped, tag = 'output window, operand 0']
    %6 = vsyncpa [#allocation3], 0
    %s7 = scalar_lea.sflag [#allocation3], 1
    %8 = vsyncpa %s7, 0
    %9 = vsyncpa [#allocation4], 0
    %s10 = scalar_lea.sflag [#allocation4], 1
    %11 = vsyncpa %s10, 0
    loop: start=0, step=1, limit=6
    $region2: #{tpu_custom_call.1} parent=1 // loop_pre_header
      _
    $region3: #{tpu_custom_call.1} parent=1 // loop_header
      %s13 = sphi 0, %s17
      %p14 = scmp.ge.s32.totalorder %s13, 6
      %s20 = sphi 0, %s32
      %s21 = sphi 0, %s28
      %s22 = sphi 0, %s20
      %s23 = sphi 0, %s21
      %s24 = sphi 0, %s22
      %s25 = sphi 0, %s23
      %s37 = sphi 0, %s39
      %s40 = sphi 0, %s37
      %s41 = sphi 0, %s40
      %s57 = sphi 0, %s41
      %s65 = sphi 0, %s67
      %s68 = sphi 0, %s65
      %s69 = sphi 0, %s68
      %s85 = sphi 0, %s69
    $region4: #{tpu_custom_call.1} parent=1 // loop_header_branch
      %16 = sbr.rel (%p14) target = $region8
    $region5: #{tpu_custom_call.1} parent=1 // loop_body
      %s18 = ssub.s32 %s13, 1
      %s19 = ssub.s32 %s13, 2
      %s26 = sadd.s32 1, %s21
      %p27 = scmp.ge.s32.totalorder %s26, 2
      %s28 = scalar_select %p27, 0, %s26
      %s29 = sadd.s32 1, %s20
      %s30 = scalar_select %p27, %s29, %s20
      %p31 = scmp.ge.s32.totalorder %s30, 2
      %s32 = scalar_select %p31, 0, %s30
      %s33 = ssub.s32 %s20, %s32
      %s34 = ssub.s32 %s21, %s28
      %s35 = sor.u32 %s33, %s34
      %p36 = scmp.eq.s32.totalorder %s35, 0
      %s38 = sadd.s32 %s37, 1
      %s39 = scalar_select %p36, %s37, %s38
      %p42 = pneg %p36
      %p43 = scmp.eq.s32.totalorder %s13, 3
      %p44 = por %p42, %p43
      %p45 = scmp.ne.s32.totalorder %s37, %s40
      %p46 = scmp.eq.s32.totalorder %s13, 0
      %p47 = por %p45, %p46
      %p48 = scmp.ne.s32.totalorder %s37, %s40
      %p49 = scmp.eq.s32.totalorder %s18, 3
      %p50 = por %p48, %p49
      %p51 = scmp.ne.s32.totalorder %s40, %s41
      %p52 = scmp.eq.s32.totalorder %s18, 0
      %p53 = por %p51, %p52
      %p54 = scmp.ne.s32.totalorder %s40, %s41
      %p55 = scmp.eq.s32.totalorder %s19, 3
      %p56 = por %p54, %p55
      %p58 = scmp.ne.s32.totalorder %s41, %s57
      %p59 = scmp.eq.s32.totalorder %s19, 0
      %p60 = por %p58, %p59
      %s61 = ssub.s32 %s20, %s32
      %s62 = ssub.s32 %s21, %s28
      %s63 = sor.u32 %s61, %s62
      %p64 = scmp.eq.s32.totalorder %s63, 0
      %s66 = sadd.s32 %s65, 1
      %s67 = scalar_select %p64, %s65, %s66
      %p70 = pneg %p64
      %p71 = scmp.eq.s32.totalorder %s13, 3
      %p72 = por %p70, %p71
      %p73 = scmp.ne.s32.totalorder %s65, %s68
      %p74 = scmp.eq.s32.totalorder %s13, 0
      %p75 = por %p73, %p74
      %p76 = scmp.ne.s32.totalorder %s65, %s68
      %p77 = scmp.eq.s32.totalorder %s18, 3
      %p78 = por %p76, %p77
      %p79 = scmp.ne.s32.totalorder %s68, %s69
      %p80 = scmp.eq.s32.totalorder %s18, 0
      %p81 = por %p79, %p80
      %p82 = scmp.ne.s32.totalorder %s68, %s69
      %p83 = scmp.eq.s32.totalorder %s19, 3
      %p84 = por %p82, %p83
      %p86 = scmp.ne.s32.totalorder %s69, %s85
      %p87 = scmp.eq.s32.totalorder %s19, 0
      %p88 = por %p86, %p87
      %p89 = scmp.le.s32.totalorder 1, %s13
      %p90 = scmp.lt.s32.totalorder %s13, 5
      %p91 = pnand %p89, %p90
      %p92 = pneg %p91
      // Predicated region
      $region9: #{tpu_custom_call.1} parent=5 // pred_check
        _
      $region10: #{tpu_custom_call.1} parent=5 // pred_check_branch
        %94 = sbr.rel (%p91) target = $region12
      $region11: #{tpu_custom_call.1} parent=5 // pred_region
        %s95 = ssub.s32 %s13, 1
      $region12: #{tpu_custom_call.1} parent=5 // pred_fallthru
        _
      %p96 = scmp.lt.s32.totalorder %s13, 4
      // Predicated region
      $region13: #{tpu_custom_call.1} parent=5 // pred_check
        %p97 = pneg %p96
      $region14: #{tpu_custom_call.1} parent=5 // pred_check_branch
        %99 = sbr.rel (%p97) target = $region16
      $region15: #{tpu_custom_call.1} parent=5 // pred_region
        // Predicated region
        $region17: #{tpu_custom_call.1} parent=15 // pred_check
          %p100 = pneg %p47
        $region18: #{tpu_custom_call.1} parent=15 // pred_check_branch
          %102 = sbr.rel (%p100) target = $region20
        $region19: #{tpu_custom_call.1} parent=15 // pred_region
          %s103 = sand.u32 %s37, 1
          %s104 = scalar_lea.sflag [#allocation3], %s103
          %s105 = sand.u32 %s37, 1
          %s106 = smul.addr %s105, 4
          %s107 = scalar_lea.vmem [#allocation2], %s106
          %s109 = ssub.s32 64, 64
          %110 = vsyncadd %s104, %s109
          %s111 = smul.addr %s20, 2
          %s112 = sadd.s32 %s21, %s111
          %s113 = smul.addr %s112, 64
          %s114 = scalar_lea.hbm %s0, %s113
          %s116 = sshll.u32 %s107, 4
          %s117 = int_to_ptr.vmem [resolvable:$true] %s116
          %119 = dma.hbm_to_vmem [thread:$0]  %s114, 64, %s117, %s104
        $region20: #{tpu_custom_call.1} parent=15 // pred_fallthru
          _
      $region16: #{tpu_custom_call.1} parent=5 // pred_fallthru
        _
      %p120 = scmp.le.s32.totalorder 1, %s13
      %p121 = scmp.lt.s32.totalorder %s13, 5
      %p122 = pnand %p120, %p121
      %p123 = pneg %p122
      // Predicated region
      $region21: #{tpu_custom_call.1} parent=5 // pred_check
        _
      $region22: #{tpu_custom_call.1} parent=5 // pred_check_branch
        %125 = sbr.rel (%p122) target = $region24
      $region23: #{tpu_custom_call.1} parent=5 // pred_region
        %s126 = ssub.s32 %s13, 1
        %s127 = sand.u32 %s40, 1
        %s128 = scalar_lea.sflag [#allocation3], %s127
        %s129 = sand.u32 %s40, 1
        %s130 = smul.addr %s129, 4
        %s131 = scalar_lea.vmem [#allocation2], %s130
        // Predicated region
        $region25: #{tpu_custom_call.1} parent=23 // pred_check
          %p132 = pneg %p53
        $region26: #{tpu_custom_call.1} parent=23 // pred_check_branch
          %134 = sbr.rel (%p132) target = $region28
        $region27: #{tpu_custom_call.1} parent=23 // pred_region
          %135 = dma.done %s128, 64
        $region28: #{tpu_custom_call.1} parent=23 // pred_fallthru
          _
        %s136 = sand.u32 %s40, 1
        %s137 = scalar_lea.sflag [#allocation3], %s136
        %s138 = sand.u32 %s40, 1
        %s139 = smul.addr %s138, 4
        %s140 = scalar_lea.vmem [#allocation2], %s139
        %p141 = pneg %p53
        %p142 = pneg %p50
        %p143 = pneg %p81
        %p144 = pneg %p78
        %s145 = sand.u32 %s68, 1
        %s146 = scalar_lea.sflag [#allocation4], %s145
        %s147 = sand.u32 %s68, 1
        %s148 = smul.addr %s147, 4
        %s149 = scalar_lea.vmem [#allocation5], %s148
        %v150 = vld [vmem:[%s131] sm:$0xf]
        %v151 = vmul.f32 %v150, %v150
        %vm152 = vcmask 1043456
        %v153 = vsel %vm152, %v151, 0.0
        %v154 = vrot.slane %v153, 4
        %v155 = vadd.f32 %v153, %v154
        %v156 = vrot.slane %v155, 2
        %v157 = vadd.f32 %v155, %v156
        %v158 = vrot.slane %v157, 1
        %v159 = vadd.f32 %v157, %v158
        %v160 = vrsqrt.pop %v159
        %v161 = vmul.f32 %v150, %v160
        %162 = vst [vmem:[%s149] sm:$0xf] %v161
        %s163 = sand.u32 %s68, 1
        %s164 = scalar_lea.sflag [#allocation4], %s163
        %s165 = sand.u32 %s68, 1
        %s166 = smul.addr %s165, 4
        %s167 = scalar_lea.vmem [#allocation5], %s166
        // Predicated region
        $region29: #{tpu_custom_call.1} parent=23 // pred_check
          %p168 = pneg %p78
        $region30: #{tpu_custom_call.1} parent=23 // pred_check_branch
          %170 = sbr.rel (%p168) target = $region32
        $region31: #{tpu_custom_call.1} parent=23 // pred_region
          %s172 = ssub.s32 64, 64
          %173 = vsyncadd %s164, %s172
          %s174 = smul.addr %s22, 2
          %s175 = sadd.s32 %s23, %s174
          %s176 = smul.addr %s175, 64
          %s177 = scalar_lea.hbm %s1, %s176
          %s179 = sshll.u32 %s167, 4
          %s180 = int_to_ptr.vmem [resolvable:$true] %s179
          %182 = dma.vmem_to_hbm [thread:$0]  %s180, 64, %s177, %s164
        $region32: #{tpu_custom_call.1} parent=23 // pred_fallthru
          _
      $region24: #{tpu_custom_call.1} parent=5 // pred_fallthru
        _
      %p183 = scmp.le.s32.totalorder 2, %s13
      // Predicated region
      $region33: #{tpu_custom_call.1} parent=5 // pred_check
        %p184 = pneg %p183
      $region34: #{tpu_custom_call.1} parent=5 // pred_check_branch
        %186 = sbr.rel (%p184) target = $region36
      $region35: #{tpu_custom_call.1} parent=5 // pred_region
        %s187 = ssub.s32 %s13, 2
        // Predicated region
        $region37: #{tpu_custom_call.1} parent=35 // pred_check
          %p188 = pneg %p84
        $region38: #{tpu_custom_call.1} parent=35 // pred_check_branch
          %190 = sbr.rel (%p188) target = $region40
        $region39: #{tpu_custom_call.1} parent=35 // pred_region
          %s191 = sand.u32 %s69, 1
          %s192 = scalar_lea.sflag [#allocation4], %s191
          %s193 = sand.u32 %s69, 1
          %s194 = smul.addr %s193, 4
          %s195 = scalar_lea.vmem [#allocation5], %s194
          %196 = dma.done %s192, 64
        $region40: #{tpu_custom_call.1} parent=35 // pred_fallthru
          _
      $region36: #{tpu_custom_call.1} parent=5 // pred_fallthru
        _
    $region6: #{tpu_custom_call.1} parent=1 // loop_footer
      %s17 = sadd.s32 1, %s13
    $region7: #{tpu_custom_call.1} parent=1 // loop_footer_branch
      %12 = sbr.rel target = $region3
    $region8: #{tpu_custom_call.1} parent=1 // loop_exit
      _
    %197 = vsyncpa [#allocation3], 1
    %s198 = scalar_lea.sflag [#allocation3], 1
    %199 = vsyncpa %s198, 1
    %200 = vsyncpa [#allocation4], 1
    %s201 = scalar_lea.sflag [#allocation4], 1
    %202 = vsyncpa %s201, 1

</llo_original>
